<compile_context>
chip_gen: v7x
topology: tpu7x:2x2x1
jax: 0.10.0
libtpu: 0.0.40
codegen_flags: <defaults>
</compile_context>

<pallas_src>
import jax
import jax.numpy as jnp
from jax.experimental import pallas as pl
from jax.experimental.pallas import tpu as pltpu


def _round_up(a, b):
    return ((a + b - 1) // b) * b


def _vmem_capacity_bytes():
    try:
        return int(pltpu.get_tpu_info().vmem_capacity_bytes)
    except Exception:
        return 64 << 20  # conservative default (v7x per-TensorCore VMEM)


# --------------------------- kernels ---------------------------------------


def _resident_kernel(x_ref, w_ref, b_ref, o_ref):
    # x_ref: (TM, Dp) activation tile (pipelined over the token axis)
    # w_ref: (Dp, Dp) pre-transposed weight (in_features, out_features), resident
    # b_ref: (1, Dp)  bias row, resident
    acc = jnp.dot(x_ref[...], w_ref[...], preferred_element_type=jnp.float32)
    o_ref[...] = (acc + b_ref[...]).astype(o_ref.dtype)


def _blocked_kernel(x_ref, w_ref, b_ref, o_ref, acc_ref):
    # Classic (M, N, K) tiled matmul with f32 VMEM accumulator.
    k = pl.program_id(2)

    @pl.when(k == 0)
    def _():
        acc_ref[...] = jnp.zeros_like(acc_ref)

    acc_ref[...] += jnp.dot(x_ref[...], w_ref[...],
                            preferred_element_type=jnp.float32)

    @pl.when(k == pl.num_programs(2) - 1)
    def _():
        o_ref[...] = (acc_ref[...] + b_ref[...]).astype(o_ref.dtype)


# --------------------------- wrapper ----------------------------------------


def linear_adapter(x, weight, bias, *, use_pallas=None, _force_path=None):
    """Pallas implementation of LinearAdapter.forward.

    x:      (..., input_dim)  (or a tuple whose first element is that tensor)
    weight: (input_dim, input_dim)   PyTorch layout (out_features, in_features)
    bias:   (input_dim,)
    Returns an array with the same shape as x.
    """
    if isinstance(x, tuple):
        x = x[0]

    orig_shape = x.shape
    d = orig_shape[-1]
    x2d = x.reshape(-1, d)
    m = x2d.shape[0]

    if _force_path is not None:
        use_pallas = True
    if use_pallas is None:
        # Tiny D / few tokens: grid overhead + lane padding dominate -> XLA.
        use_pallas = (d > 256) and (m * d > (1 << 16))
    if not use_pallas:
        return (x2d @ weight.T + bias).reshape(orig_shape)

    dtype = x2d.dtype
    itemsize = jnp.dtype(dtype).itemsize
    w_itemsize = jnp.dtype(weight.dtype).itemsize
    b_itemsize = jnp.dtype(bias.dtype).itemsize
    sublane = {4: 8, 2: 16, 1: 32}.get(itemsize, 8)  # dtype-native sublane tile

    dp = _round_up(d, 128)  # lane-dense feature dim

    # One-time O(D^2) transpose to (in_features, out_features): the kernel then
    # runs a plain MXU matmul (no transposed-RHS contraction repeated per tile).
    if dp != d:
        w_t = jnp.zeros((dp, dp), weight.dtype).at[:d, :d].set(weight.T)
        b_row = jnp.zeros((1, dp), bias.dtype).at[:, :d].set(bias.reshape(1, d))
        # Feature padding is required for a correct contraction.  The token
        # axis is NOT padded: the grid uses cdiv + ragged-tail handling.
        x_in = jnp.zeros((m, dp), dtype).at[:, :d].set(x2d)
    else:
        w_t = weight.T
        b_row = bias.reshape(1, d)
        x_in = x2d

    vmem_cap = _vmem_capacity_bytes()
    budget = max(vmem_cap - (8 << 20), 24 << 20)

    w_bytes = dp * dp * w_itemsize
    if _force_path == "resident":
        resident = True
    elif _force_path == "blocked":
        resident = False
    else:
        resident = w_bytes <= int(0.4 * budget)

    cost = pl.CostEstimate(
        flops=2 * m * dp * dp,
        transcendentals=0,
        bytes_accessed=(2 * m * dp) * itemsize + w_bytes + dp * b_itemsize,
    )

    if resident:
        # ---- weight-resident path: pipelined "parallel" grid over token tiles.
        def est(tm):
            return (w_bytes                       # single-buffered weight
                    + 2 * dp * b_itemsize         # bias
                    + 2 * tm * dp * itemsize      # x tile, double-buffered
                    + 2 * tm * dp * itemsize      # out tile, double-buffered
                    + (2 << 20))                  # slack

        tm = 512
        while tm > 64 and est(tm) > int(0.85 * budget):
            tm //= 2
        tm = min(tm, _round_up(m, sublane))

        vmem_limit = int(min(max(est(tm) + (4 << 20), 32 << 20),
                             vmem_cap - (4 << 20)))

        def build(resident_pipeline, limit):
            return pl.pallas_call(
                _resident_kernel,
                out_shape=jax.ShapeDtypeStruct((m, dp), dtype),
                grid=(pl.cdiv(m, tm),),
                in_specs=[
                    pl.BlockSpec((tm, dp), lambda i: (i, 0)),         # x tile
                    pl.BlockSpec((dp, dp), lambda i: (0, 0),
                                 **resident_pipeline),                # weight
                    pl.BlockSpec((1, dp), lambda i: (0, 0),
                                 **resident_pipeline),                # bias
                ],
                out_specs=pl.BlockSpec((tm, dp), lambda i: (i, 0)),
                compiler_params=pltpu.CompilerParams(
                    dimension_semantics=("parallel",),
                    vmem_limit_bytes=limit,
                ),
                cost_estimate=cost,
            )

        try:
            # Constant-index operands gain nothing from double buffering:
            # single-buffer them to halve the resident weight footprint.
            out = build(dict(pipeline_mode=pl.Buffered(buffer_count=1)),
                        vmem_limit)(x_in, w_t, b_row)
        except Exception:
            # Older JAX without single-buffered pipeline_mode support: retry
            # with default double-buffering and a correspondingly larger limit.
            fb_limit = int(min(vmem_limit + w_bytes + 2 * dp * b_itemsize,
                               vmem_cap - (4 << 20)))
            out = build({}, fb_limit)(x_in, w_t, b_row)
    else:
        # ---- blocked (M, N, K) path for large D (weight can't stay resident).
        tn = 512 if dp % 512 == 0 else (256 if dp % 256 == 0 else 128)
        tk = tn

        def est(tm):
            return (2 * tm * tk * itemsize        # x tiles, double-buffered
                    + 2 * tk * tn * w_itemsize    # weight tiles, double-buffered
                    + 2 * tm * tn * itemsize      # out tiles, double-buffered
                    + tm * tn * 4                 # f32 accumulator scratch
                    + 4 * tn * b_itemsize
                    + (2 << 20))

        tm = 512
        while tm > 64 and est(tm) > int(0.85 * budget):
            tm //= 2
        tm = min(tm, _round_up(m, sublane))

        vmem_limit = int(min(max(est(tm) + (4 << 20), 32 << 20),
                             vmem_cap - (4 << 20)))

        out = pl.pallas_call(
            _blocked_kernel,
            out_shape=jax.ShapeDtypeStruct((m, dp), dtype),
            grid=(pl.cdiv(m, tm), dp // tn, dp // tk),
            in_specs=[
                pl.BlockSpec((tm, tk), lambda i, j, k: (i, k)),   # x
                pl.BlockSpec((tk, tn), lambda i, j, k: (k, j)),   # weight (in,out)
                pl.BlockSpec((1, tn), lambda i, j, k: (0, j)),    # bias
            ],
            out_specs=pl.BlockSpec((tm, tn), lambda i, j, k: (i, j)),
            scratch_shapes=[pltpu.VMEM((tm, tn), jnp.float32)],
            compiler_params=pltpu.CompilerParams(
                dimension_semantics=("parallel", "parallel", "arbitrary"),
                vmem_limit_bytes=vmem_limit,
            ),
            cost_estimate=cost,
        )(x_in, w_t, b_row)

    if dp != d:
        out = out[:, :d]
    return out.reshape(orig_shape)


if __name__ == "__main__":
    # Small shapes implied by the module: (batch, seq, input_dim), Linear on
    # the last (feature) axis.
    batch, seq, input_dim = 2, 8, 32

    key = jax.random.PRNGKey(0)
    kx, kw, kb = jax.random.split(key, 3)

    x = jax.random.normal(kx, (batch, seq, input_dim), dtype=jnp.float32)

    # Deterministic PyTorch-like init: uniform(-1/sqrt(in), 1/sqrt(in)).
    bound = 1.0 / (input_dim ** 0.5)
    weight = jax.random.uniform(
        kw, (input_dim, input_dim), dtype=jnp.float32, minval=-bound, maxval=bound
    )  # (out_features, in_features), PyTorch layout
    bias = jax.random.uniform(
        kb, (input_dim,), dtype=jnp.float32, minval=-bound, maxval=bound
    )

    y_ref = x @ weight.T + bias

    # Exercise both Pallas paths (tuple input handled like the module does),
    # plus the auto XLA fallback used for tiny shapes.
    y_resident = linear_adapter((x,), weight, bias, _force_path="resident")
    y_blocked = linear_adapter(x, weight, bias, _force_path="blocked")
    y_auto = linear_adapter(x, weight, bias)  # d=32 -> XLA fast path
    jax.block_until_ready((y_resident, y_blocked, y_auto))

    for name, y in (("resident", y_resident), ("blocked", y_blocked),
                    ("auto", y_auto)):
        assert y.shape == x.shape, f"shape mismatch ({name})"
        assert jnp.allclose(y, y_ref, atol=1e-5, rtol=1e-5), f"mismatch ({name})"

    print("KERNEL_OK")
</pallas_src>

<mosaic_0001>
module attributes {stable_mosaic.version = 11 : i64} {
  func.func @_resident_kernel(%arg0: i32, %arg1: memref<16x128xf32, #tpu.memory_space<vmem>>, %arg2: memref<128x128xf32, #tpu.memory_space<vmem>>, %arg3: memref<1x128xf32, #tpu.memory_space<vmem>>, %arg4: memref<16x128xf32, #tpu.memory_space<vmem>>) attributes {dimension_semantics = [#tpu.dimension_semantics<parallel>], iteration_bounds = array<i64: 1>, scalar_prefetch = 0 : i64, scratch_operands = 0 : i64, tpu.core_type = #tpu.core_type<tc>, window_params = [{transform_indices = @transform_0, window_bounds = array<i64: 16, 128>}, {pipeline_mode = #tpu.pipeline_mode<synchronous>, transform_indices = @transform_1, window_bounds = array<i64: 128, 128>}, {pipeline_mode = #tpu.pipeline_mode<synchronous>, transform_indices = @transform_2, window_bounds = array<i64: 1, 128>}, {transform_indices = @transform_3, window_bounds = array<i64: 16, 128>}]} {
    %c0 = arith.constant 0 : index
    %c0_0 = arith.constant 0 : index
    %0 = vector.load %arg1[%c0, %c0_0] : memref<16x128xf32, #tpu.memory_space<vmem>>, vector<16x128xf32>
    %c0_1 = arith.constant 0 : index
    %c0_2 = arith.constant 0 : index
    %1 = vector.load %arg2[%c0_1, %c0_2] : memref<128x128xf32, #tpu.memory_space<vmem>>, vector<128x128xf32>
    %cst = arith.constant dense<0.000000e+00> : vector<16x128xf32>
    %2 = tpu.matmul %0, %1, %cst {dimension_numbers = #tpu.dot_dimension_numbers<[1], [0], [0], [1], [0, 0, 1, 1], [], []>} : vector<16x128xf32>, vector<128x128xf32>, vector<16x128xf32> -> vector<16x128xf32>
    %c0_3 = arith.constant 0 : index
    %c0_4 = arith.constant 0 : index
    %3 = vector.load %arg3[%c0_3, %c0_4] : memref<1x128xf32, #tpu.memory_space<vmem>>, vector<1x128xf32>
    %4 = vector.broadcast %3 : vector<1x128xf32> to vector<16x128xf32>
    %5 = arith.addf %2, %4 : vector<16x128xf32>
    %c0_5 = arith.constant 0 : index
    %c0_6 = arith.constant 0 : index
    %6 = vector.load %arg4[%c0_5, %c0_6] : memref<16x128xf32, #tpu.memory_space<vmem>>, vector<16x128xf32>
    tpu.vector_store %arg4[%c0_5, %c0_6], %5 {strides = array<i32>} : memref<16x128xf32, #tpu.memory_space<vmem>>, vector<16x128xf32>,
    return
  }
  func.func @transform_0(%arg0: i32) -> (i32, i32) {
    %c0_i32 = arith.constant 0 : i32
    %c0_i32_0 = arith.constant 0 : i32
    return %arg0, %c0_i32 : i32, i32
  }
  func.func @transform_1(%arg0: i32) -> (i32, i32) {
    %c0_i32 = arith.constant 0 : i32
    %c0_i32_0 = arith.constant 0 : i32
    %c0_i32_1 = arith.constant 0 : i32
    return %c0_i32, %c0_i32_0 : i32, i32
  }
  func.func @transform_2(%arg0: i32) -> (i32, i32) {
    %c0_i32 = arith.constant 0 : i32
    %c0_i32_0 = arith.constant 0 : i32
    %c0_i32_1 = arith.constant 0 : i32
    return %c0_i32, %c0_i32_0 : i32, i32
  }
  func.func @transform_3(%arg0: i32) -> (i32, i32) {
    %c0_i32 = arith.constant 0 : i32
    %c0_i32_0 = arith.constant 0 : i32
    return %arg0, %c0_i32 : i32, i32
  }
}

module attributes {stable_mosaic.version = 11 : i64} {
  func.func @_resident_kernel(%arg0: i32, %arg1: memref<16x128xf32, #tpu.memory_space<vmem>>, %arg2: memref<128x128xf32, #tpu.memory_space<vmem>>, %arg3: memref<1x128xf32, #tpu.memory_space<vmem>>, %arg4: memref<16x128xf32, #tpu.memory_space<vmem>>) attributes {dimension_semantics = [#tpu.dimension_semantics<parallel>], iteration_bounds = array<i64: 1>, scalar_prefetch = 0 : i64, scratch_operands = 0 : i64, tpu.core_type = #tpu.core_type<tc>, window_params = [{transform_indices = @transform_0, window_bounds = array<i64: 16, 128>}, {pipeline_mode = #tpu.pipeline_mode<synchronous>, transform_indices = @transform_1, window_bounds = array<i64: 128, 128>}, {pipeline_mode = #tpu.pipeline_mode<synchronous>, transform_indices = @transform_2, window_bounds = array<i64: 1, 128>}, {transform_indices = @transform_3, window_bounds = array<i64: 16, 128>}]} {
    %c0 = arith.constant 0 : index
    %c0_0 = arith.constant 0 : index
    %0 = vector.load %arg1[%c0, %c0_0] : memref<16x128xf32, #tpu.memory_space<vmem>>, vector<16x128xf32>
    %c0_1 = arith.constant 0 : index
    %c0_2 = arith.constant 0 : index
    %1 = vector.load %arg2[%c0_1, %c0_2] : memref<128x128xf32, #tpu.memory_space<vmem>>, vector<128x128xf32>
    %cst = arith.constant dense<0.000000e+00> : vector<16x128xf32>
    %2 = tpu.matmul %0, %1, %cst {dimension_numbers = #tpu.dot_dimension_numbers<[1], [0], [0], [1], [0, 0, 1, 1], [], []>} : vector<16x128xf32>, vector<128x128xf32>, vector<16x128xf32> -> vector<16x128xf32>
    %c0_3 = arith.constant 0 : index
    %c0_4 = arith.constant 0 : index
    %3 = vector.load %arg3[%c0_3, %c0_4] : memref<1x128xf32, #tpu.memory_space<vmem>>, vector<1x128xf32>
    %4 = vector.broadcast %3 : vector<1x128xf32> to vector<16x128xf32>
    %5 = arith.addf %2, %4 : vector<16x128xf32>
    %c0_5 = arith.constant 0 : index
    %c0_6 = arith.constant 0 : index
    %6 = vector.load %arg4[%c0_5, %c0_6] : memref<16x128xf32, #tpu.memory_space<vmem>>, vector<16x128xf32>
    tpu.vector_store %arg4[%c0_5, %c0_6], %5 {strides = array<i32>} : memref<16x128xf32, #tpu.memory_space<vmem>>, vector<16x128xf32>,
    return
  }
  func.func @transform_0(%arg0: i32) -> (i32, i32) {
    %c0_i32 = arith.constant 0 : i32
    %c0_i32_0 = arith.constant 0 : i32
    return %arg0, %c0_i32 : i32, i32
  }
  func.func @transform_1(%arg0: i32) -> (i32, i32) {
    %c0_i32 = arith.constant 0 : i32
    %c0_i32_0 = arith.constant 0 : i32
    %c0_i32_1 = arith.constant 0 : i32
    return %c0_i32, %c0_i32_0 : i32, i32
  }
  func.func @transform_2(%arg0: i32) -> (i32, i32) {
    %c0_i32 = arith.constant 0 : i32
    %c0_i32_0 = arith.constant 0 : i32
    %c0_i32_1 = arith.constant 0 : i32
    return %c0_i32, %c0_i32_0 : i32, i32
  }
  func.func @transform_3(%arg0: i32) -> (i32, i32) {
    %c0_i32 = arith.constant 0 : i32
    %c0_i32_0 = arith.constant 0 : i32
    return %arg0, %c0_i32 : i32, i32
  }
}

</mosaic_0001>

<llo_original>
// kernel: tpu_custom_call.1
$region0: #{tpu_custom_call.1}
  #allocation0 [shape = 'u32[]', space=smem, size = 0x4, offset = 0x4, fixed_abs, tag = 'smem constant byte address 0x4 - core index']
  #allocation1 [shape = 'u32[144,128]{1,0:T(1,128)}', space=vmem, size = 0x12000, scoped, tag = 'internal scratch']
  %s0 = inlined_call_operand.hbm [shape: f32[16,128], index: 0, kind: input, shape index: {}]
  %s1 = inlined_call_operand.hbm [shape: f32[128,128], index: 1, kind: input, shape index: {}]
  %s2 = inlined_call_operand.vmem [shape: f32[1,128], index: 2, kind: input, shape index: {}]
  %s3 = inlined_call_operand.hbm [shape: f32[16,128], index: 3, kind: output, shape index: {}]
  %s4 = sld [smem:[#allocation0]]
  $region30: #{tpu_custom_call.1} parent=0
    _
  %s6 = ssub.s32 1, %s4
  %s7 = scalar_select 0, %s6, %s4
  $region1: #{tpu_custom_call.1} parent=0
    #allocation2 [shape = 'u8[8192]{0}', space=vmem, size = 0x2000, scoped, tag = 'input window, operand 0, single buffered']
    #allocation3 [shape = 's32[1]{0}', space=sflag, size = 0x4, scoped, tag = 'scoped memory for tpu_custom_call.1']
    #allocation4 [shape = 's32[1]{0}', space=sflag, size = 0x4, scoped, tag = 'scoped memory for tpu_custom_call.1']
    #allocation5 [shape = 'u8[65536]{0}', space=vmem, size = 0x10000, scoped, tag = 'input window, operand 1, single buffered']
    #allocation6 [shape = 's32[1]{0}', space=sflag, size = 0x4, scoped, tag = 'scoped memory for tpu_custom_call.1']
    #allocation7 [shape = 'u8[8192]{0}', space=vmem, size = 0x2000, scoped, tag = 'output window, operand 0, single buffered']
    %8 = vsyncpa [#allocation3], 0
    %9 = vsyncpa [#allocation6], 0
    %10 = vsyncpa [#allocation4], 0
    // Predicated region
    $region2: #{tpu_custom_call.1} parent=1 // pred_check
      _
    $region3: #{tpu_custom_call.1} parent=1 // pred_check_branch
      %12 = sbr.rel (0) target = $region5
    $region4: #{tpu_custom_call.1} parent=1 // pred_region
      %s14 = ssub.s32 256, 256
      %15 = vsyncadd [#allocation3], %s14
      %s16 = sshll.u32 [#allocation2], 4
      %s17 = int_to_ptr.vmem [resolvable:$true] %s16
      %22 = dma.hbm_to_vmem [thread:$0]  %s0, 256, %s17, [#allocation3], 128, 128, 8
    $region5: #{tpu_custom_call.1} parent=1 // pred_fallthru
      _
    // Predicated region
    $region6: #{tpu_custom_call.1} parent=1 // pred_check
      _
    $region7: #{tpu_custom_call.1} parent=1 // pred_check_branch
      %24 = sbr.rel (0) target = $region9
    $region8: #{tpu_custom_call.1} parent=1 // pred_region
      %s26 = ssub.s32 2048, 2048
      %27 = vsyncadd [#allocation6], %s26
      %s28 = sshll.u32 [#allocation5], 4
      %s29 = int_to_ptr.vmem [resolvable:$true] %s28
      %34 = dma.hbm_to_vmem [thread:$0]  %s1, 2048, %s29, [#allocation6], 128, 128, 8
    $region9: #{tpu_custom_call.1} parent=1 // pred_fallthru
      _
    // Predicated region
    $region10: #{tpu_custom_call.1} parent=1 // pred_check
      _
    $region11: #{tpu_custom_call.1} parent=1 // pred_check_branch
      %36 = sbr.rel (0) target = $region13
    $region12: #{tpu_custom_call.1} parent=1 // pred_region
      _
    $region13: #{tpu_custom_call.1} parent=1 // pred_fallthru
      _
    // Predicated region
    $region14: #{tpu_custom_call.1} parent=1 // pred_check
      _
    $region15: #{tpu_custom_call.1} parent=1 // pred_check_branch
      %38 = sbr.rel (0) target = $region17
    $region16: #{tpu_custom_call.1} parent=1 // pred_region
      %39 = dma.done [#allocation3], 256
    $region17: #{tpu_custom_call.1} parent=1 // pred_fallthru
      _
    // Predicated region
    $region18: #{tpu_custom_call.1} parent=1 // pred_check
      _
    $region19: #{tpu_custom_call.1} parent=1 // pred_check_branch
      %41 = sbr.rel (0) target = $region21
    $region20: #{tpu_custom_call.1} parent=1 // pred_region
      %42 = dma.done [#allocation6], 2048
    $region21: #{tpu_custom_call.1} parent=1 // pred_fallthru
      _
    %v43 = vld [vmem:[#allocation2] sm:$0xff]
    %v44 = vld [vmem:[#allocation2 + $0x8] sm:$0xff]
    %v45 = vld [vmem:[#allocation5] sm:$0xff]
    %v46 = vld [vmem:[#allocation5 + $0x8] sm:$0xff]
    %v47 = vld [vmem:[#allocation5 + $0x10] sm:$0xff]
    %v48 = vld [vmem:[#allocation5 + $0x18] sm:$0xff]
    %v49 = vld [vmem:[#allocation5 + $0x20] sm:$0xff]
    %v50 = vld [vmem:[#allocation5 + $0x28] sm:$0xff]
    %v51 = vld [vmem:[#allocation5 + $0x30] sm:$0xff]
    %v52 = vld [vmem:[#allocation5 + $0x38] sm:$0xff]
    %v53 = vld [vmem:[#allocation5 + $0x40] sm:$0xff]
    %v54 = vld [vmem:[#allocation5 + $0x48] sm:$0xff]
    %v55 = vld [vmem:[#allocation5 + $0x50] sm:$0xff]
    %v56 = vld [vmem:[#allocation5 + $0x58] sm:$0xff]
    %v57 = vld [vmem:[#allocation5 + $0x60] sm:$0xff]
    %v58 = vld [vmem:[#allocation5 + $0x68] sm:$0xff]
    %v59 = vld [vmem:[#allocation5 + $0x70] sm:$0xff]
    %v60 = vld [vmem:[#allocation5 + $0x78] sm:$0xff]
    %v61 = vld [vmem:[%s2] sm:$0x1]
    %v63 = vlaneseq
    %v64 = vshrl.u32 %v63, 7
    %v65 = vsub.s32 0, %v64
    %v66 = vrot.slane %v61, %v65
    %68 = vmatprep.subr.mxu0 0.0
    %69 = vmatpush1.msra.mxu0 %v45
    %70 = vmatprep.subr.mxu0 0.0
    %71 = vmatpush1.msra.mxu0 %v46
    %72 = vmatprep.subr.mxu0 0.0
    %73 = vmatpush1.msra.mxu0 %v47
    %74 = vmatprep.subr.mxu0 0.0
    %75 = vmatpush1.msra.mxu0 %v48
    %76 = vmatprep.subr.mxu0 0.0
    %77 = vmatpush1.msra.mxu0 %v49
    %78 = vmatprep.subr.mxu0 0.0
    %79 = vmatpush1.msra.mxu0 %v50
    %80 = vmatprep.subr.mxu0 0.0
    %81 = vmatpush1.msra.mxu0 %v51
    %82 = vmatprep.subr.mxu0 0.0
    %83 = vmatpush1.msra.mxu0 %v52
    %84 = vmatprep.subr.mxu0 0.0
    %85 = vmatpush1.msra.mxu0 %v53
    %86 = vmatprep.subr.mxu0 0.0
    %87 = vmatpush1.msra.mxu0 %v54
    %88 = vmatprep.subr.mxu0 0.0
    %89 = vmatpush1.msra.mxu0 %v55
    %90 = vmatprep.subr.mxu0 0.0
    %91 = vmatpush1.msra.mxu0 %v56
    %92 = vmatprep.subr.mxu0 0.0
    %93 = vmatpush1.msra.mxu0 %v57
    %94 = vmatprep.subr.mxu0 0.0
    %95 = vmatpush1.msra.mxu0 %v58
    %96 = vmatprep.subr.mxu0 0.0
    %97 = vmatpush1.msra.mxu0 %v59
    %98 = vmatprep.subr.mxu0 0.0
    %99 = vmatpush1.msra.mxu0 %v60
    %100 = vmatprep.subr.mxu0 0.0
    %101 = vmatpush1.msra.mxu0 0.0
    %102 = vmatprep.subr.mxu0 0.0
    %103 = vmatpush1.msra.mxu0 0.0
    %104 = vmatprep.subr.mxu0 0.0
    %105 = vmatpush1.msra.mxu0 0.0
    %106 = vmatprep.subr.mxu0 0.0
    %107 = vmatpush1.msra.mxu0 0.0
    %108 = vmatprep.subr.mxu0 0.0
    %109 = vmatpush1.msra.mxu0 0.0
    %110 = vmatprep.subr.mxu0 0.0
    %111 = vmatpush1.msra.mxu0 0.0
    %112 = vmatprep.subr.mxu0 0.0
    %113 = vmatpush1.msra.mxu0 0.0
    %114 = vmatprep.subr.mxu0 0.0
    %115 = vmatpush1.msra.mxu0 0.0
    %116 = vmatprep.subr.mxu0 0.0
    %117 = vmatpush1.msra.mxu0 0.0
    %118 = vmatprep.subr.mxu0 0.0
    %119 = vmatpush1.msra.mxu0 0.0
    %120 = vmatprep.subr.mxu0 0.0
    %121 = vmatpush1.msra.mxu0 0.0
    %122 = vmatprep.subr.mxu0 0.0
    %123 = vmatpush1.msra.mxu0 0.0
    %124 = vmatprep.subr.mxu0 0.0
    %125 = vmatpush1.msra.mxu0 0.0
    %126 = vmatprep.subr.mxu0 0.0
    %127 = vmatpush1.msra.mxu0 0.0
    %128 = vmatprep.subr.mxu0 0.0
    %129 = vmatpush1.msra.mxu0 0.0
    %130 = vmatprep.subr.mxu0 0.0
    %131 = vmatpush1.msra.mxu0 0.0
    %132 = vmatprep.mubr.f32.mxu0 0.0
    %133 = vmatmul.mubr.f32.gmra.mrb[0].mxu0 %v43
    %v134 = vpop.f32.mrb[0].mxu0
    %v135 = vadd.f32 %v66, %v134
    %v136 = vpop.f32.mrb[0].mxu0
    %137 = vmatprep.mubr.f32.mxu0 0.0
    %138 = vmatmul.mubr.f32.gmra.mrb[0].mxu0 %v44
    %v139 = vpop.f32.mrb[0].mxu0
    %v140 = vadd.f32 %v66, %v139
    %v141 = vpop.f32.mrb[0].mxu0
    %142 = vdwg.mxu0
    %143 = vst [vmem:[#allocation7] sm:$0xff] %v135
    %144 = vst [vmem:[#allocation7 + $0x8] sm:$0xff] %v140
    // Predicated region
    $region22: #{tpu_custom_call.1} parent=1 // pred_check
      _
    $region23: #{tpu_custom_call.1} parent=1 // pred_check_branch
      %146 = sbr.rel (0) target = $region25
    $region24: #{tpu_custom_call.1} parent=1 // pred_region
      %s148 = ssub.s32 256, 256
      %149 = vsyncadd [#allocation4], %s148
      %s150 = sshll.u32 [#allocation7], 4
      %s151 = int_to_ptr.vmem [resolvable:$true] %s150
      %156 = dma.vmem_to_hbm [thread:$0]  %s151, 256, %s3, [#allocation4], 128, 128, 8
    $region25: #{tpu_custom_call.1} parent=1 // pred_fallthru
      _
    // Predicated region
    $region26: #{tpu_custom_call.1} parent=1 // pred_check
      _
    $region27: #{tpu_custom_call.1} parent=1 // pred_check_branch
      %158 = sbr.rel (0) target = $region29
    $region28: #{tpu_custom_call.1} parent=1 // pred_region
      %159 = dma.done [#allocation4], 256
    $region29: #{tpu_custom_call.1} parent=1 // pred_fallthru
      _
    %160 = vsyncpa [#allocation3], 1
    %161 = vsyncpa [#allocation6], 1
    %162 = vsyncpa [#allocation4], 1

// kernel: tpu_custom_call.1
$region0: #{tpu_custom_call.1}
  #allocation0 [shape = 'u32[]', space=smem, size = 0x4, offset = 0x4, fixed_abs, tag = 'smem constant byte address 0x4 - core index']
  #allocation1 [shape = 'u32[144,128]{1,0:T(1,128)}', space=vmem, size = 0x12000, scoped, tag = 'internal scratch']
  %s0 = inlined_call_operand.hbm [shape: f32[16,128], index: 0, kind: input, shape index: {}]
  %s1 = inlined_call_operand.hbm [shape: f32[128,128], index: 1, kind: input, shape index: {}]
  %s2 = inlined_call_operand.vmem [shape: f32[1,128], index: 2, kind: input, shape index: {}]
  %s3 = inlined_call_operand.hbm [shape: f32[16,128], index: 3, kind: output, shape index: {}]
  %s4 = sld [smem:[#allocation0]]
  $region30: #{tpu_custom_call.1} parent=0
    _
  %s6 = ssub.s32 1, %s4
  %s7 = scalar_select 0, %s6, %s4
  $region1: #{tpu_custom_call.1} parent=0
    #allocation2 [shape = 'u8[8192]{0}', space=vmem, size = 0x2000, scoped, tag = 'input window, operand 0, single buffered']
    #allocation3 [shape = 's32[1]{0}', space=sflag, size = 0x4, scoped, tag = 'scoped memory for tpu_custom_call.1']
    #allocation4 [shape = 's32[1]{0}', space=sflag, size = 0x4, scoped, tag = 'scoped memory for tpu_custom_call.1']
    #allocation5 [shape = 'u8[65536]{0}', space=vmem, size = 0x10000, scoped, tag = 'input window, operand 1, single buffered']
    #allocation6 [shape = 's32[1]{0}', space=sflag, size = 0x4, scoped, tag = 'scoped memory for tpu_custom_call.1']
    #allocation7 [shape = 'u8[8192]{0}', space=vmem, size = 0x2000, scoped, tag = 'output window, operand 0, single buffered']
    %8 = vsyncpa [#allocation3], 0
    %9 = vsyncpa [#allocation6], 0
    %10 = vsyncpa [#allocation4], 0
    // Predicated region
    $region2: #{tpu_custom_call.1} parent=1 // pred_check
      _
    $region3: #{tpu_custom_call.1} parent=1 // pred_check_branch
      %12 = sbr.rel (0) target = $region5
    $region4: #{tpu_custom_call.1} parent=1 // pred_region
      %s14 = ssub.s32 256, 256
      %15 = vsyncadd [#allocation3], %s14
      %s16 = sshll.u32 [#allocation2], 4
      %s17 = int_to_ptr.vmem [resolvable:$true] %s16
      %22 = dma.hbm_to_vmem [thread:$0]  %s0, 256, %s17, [#allocation3], 128, 128, 8
    $region5: #{tpu_custom_call.1} parent=1 // pred_fallthru
      _
    // Predicated region
    $region6: #{tpu_custom_call.1} parent=1 // pred_check
      _
    $region7: #{tpu_custom_call.1} parent=1 // pred_check_branch
      %24 = sbr.rel (0) target = $region9
    $region8: #{tpu_custom_call.1} parent=1 // pred_region
      %s26 = ssub.s32 2048, 2048
      %27 = vsyncadd [#allocation6], %s26
      %s28 = sshll.u32 [#allocation5], 4
      %s29 = int_to_ptr.vmem [resolvable:$true] %s28
      %34 = dma.hbm_to_vmem [thread:$0]  %s1, 2048, %s29, [#allocation6], 128, 128, 8
    $region9: #{tpu_custom_call.1} parent=1 // pred_fallthru
      _
    // Predicated region
    $region10: #{tpu_custom_call.1} parent=1 // pred_check
      _
    $region11: #{tpu_custom_call.1} parent=1 // pred_check_branch
      %36 = sbr.rel (0) target = $region13
    $region12: #{tpu_custom_call.1} parent=1 // pred_region
      _
    $region13: #{tpu_custom_call.1} parent=1 // pred_fallthru
      _
    // Predicated region
    $region14: #{tpu_custom_call.1} parent=1 // pred_check
      _
    $region15: #{tpu_custom_call.1} parent=1 // pred_check_branch
      %38 = sbr.rel (0) target = $region17
    $region16: #{tpu_custom_call.1} parent=1 // pred_region
      %39 = dma.done [#allocation3], 256
    $region17: #{tpu_custom_call.1} parent=1 // pred_fallthru
      _
    // Predicated region
    $region18: #{tpu_custom_call.1} parent=1 // pred_check
      _
    $region19: #{tpu_custom_call.1} parent=1 // pred_check_branch
      %41 = sbr.rel (0) target = $region21
    $region20: #{tpu_custom_call.1} parent=1 // pred_region
      %42 = dma.done [#allocation6], 2048
    $region21: #{tpu_custom_call.1} parent=1 // pred_fallthru
      _
    %v43 = vld [vmem:[#allocation2] sm:$0xff]
    %v44 = vld [vmem:[#allocation2 + $0x8] sm:$0xff]
    %v45 = vld [vmem:[#allocation5] sm:$0xff]
    %v46 = vld [vmem:[#allocation5 + $0x8] sm:$0xff]
    %v47 = vld [vmem:[#allocation5 + $0x10] sm:$0xff]
    %v48 = vld [vmem:[#allocation5 + $0x18] sm:$0xff]
    %v49 = vld [vmem:[#allocation5 + $0x20] sm:$0xff]
    %v50 = vld [vmem:[#allocation5 + $0x28] sm:$0xff]
    %v51 = vld [vmem:[#allocation5 + $0x30] sm:$0xff]
    %v52 = vld [vmem:[#allocation5 + $0x38] sm:$0xff]
    %v53 = vld [vmem:[#allocation5 + $0x40] sm:$0xff]
    %v54 = vld [vmem:[#allocation5 + $0x48] sm:$0xff]
    %v55 = vld [vmem:[#allocation5 + $0x50] sm:$0xff]
    %v56 = vld [vmem:[#allocation5 + $0x58] sm:$0xff]
    %v57 = vld [vmem:[#allocation5 + $0x60] sm:$0xff]
    %v58 = vld [vmem:[#allocation5 + $0x68] sm:$0xff]
    %v59 = vld [vmem:[#allocation5 + $0x70] sm:$0xff]
    %v60 = vld [vmem:[#allocation5 + $0x78] sm:$0xff]
    %v61 = vld [vmem:[%s2] sm:$0x1]
    %v63 = vlaneseq
    %v64 = vshrl.u32 %v63, 7
    %v65 = vsub.s32 0, %v64
    %v66 = vrot.slane %v61, %v65
    %68 = vmatprep.subr.mxu0 0.0
    %69 = vmatpush1.msra.mxu0 %v45
    %70 = vmatprep.subr.mxu0 0.0
    %71 = vmatpush1.msra.mxu0 %v46
    %72 = vmatprep.subr.mxu0 0.0
    %73 = vmatpush1.msra.mxu0 %v47
    %74 = vmatprep.subr.mxu0 0.0
    %75 = vmatpush1.msra.mxu0 %v48
    %76 = vmatprep.subr.mxu0 0.0
    %77 = vmatpush1.msra.mxu0 %v49
    %78 = vmatprep.subr.mxu0 0.0
    %79 = vmatpush1.msra.mxu0 %v50
    %80 = vmatprep.subr.mxu0 0.0
    %81 = vmatpush1.msra.mxu0 %v51
    %82 = vmatprep.subr.mxu0 0.0
    %83 = vmatpush1.msra.mxu0 %v52
    %84 = vmatprep.subr.mxu0 0.0
    %85 = vmatpush1.msra.mxu0 %v53
    %86 = vmatprep.subr.mxu0 0.0
    %87 = vmatpush1.msra.mxu0 %v54
    %88 = vmatprep.subr.mxu0 0.0
    %89 = vmatpush1.msra.mxu0 %v55
    %90 = vmatprep.subr.mxu0 0.0
    %91 = vmatpush1.msra.mxu0 %v56
    %92 = vmatprep.subr.mxu0 0.0
    %93 = vmatpush1.msra.mxu0 %v57
    %94 = vmatprep.subr.mxu0 0.0
    %95 = vmatpush1.msra.mxu0 %v58
    %96 = vmatprep.subr.mxu0 0.0
    %97 = vmatpush1.msra.mxu0 %v59
    %98 = vmatprep.subr.mxu0 0.0
    %99 = vmatpush1.msra.mxu0 %v60
    %100 = vmatprep.subr.mxu0 0.0
    %101 = vmatpush1.msra.mxu0 0.0
    %102 = vmatprep.subr.mxu0 0.0
    %103 = vmatpush1.msra.mxu0 0.0
    %104 = vmatprep.subr.mxu0 0.0
    %105 = vmatpush1.msra.mxu0 0.0
    %106 = vmatprep.subr.mxu0 0.0
    %107 = vmatpush1.msra.mxu0 0.0
    %108 = vmatprep.subr.mxu0 0.0
    %109 = vmatpush1.msra.mxu0 0.0
    %110 = vmatprep.subr.mxu0 0.0
    %111 = vmatpush1.msra.mxu0 0.0
    %112 = vmatprep.subr.mxu0 0.0
    %113 = vmatpush1.msra.mxu0 0.0
    %114 = vmatprep.subr.mxu0 0.0
    %115 = vmatpush1.msra.mxu0 0.0
    %116 = vmatprep.subr.mxu0 0.0
    %117 = vmatpush1.msra.mxu0 0.0
    %118 = vmatprep.subr.mxu0 0.0
    %119 = vmatpush1.msra.mxu0 0.0
    %120 = vmatprep.subr.mxu0 0.0
    %121 = vmatpush1.msra.mxu0 0.0
    %122 = vmatprep.subr.mxu0 0.0
    %123 = vmatpush1.msra.mxu0 0.0
    %124 = vmatprep.subr.mxu0 0.0
    %125 = vmatpush1.msra.mxu0 0.0
    %126 = vmatprep.subr.mxu0 0.0
    %127 = vmatpush1.msra.mxu0 0.0
    %128 = vmatprep.subr.mxu0 0.0
    %129 = vmatpush1.msra.mxu0 0.0
    %130 = vmatprep.subr.mxu0 0.0
    %131 = vmatpush1.msra.mxu0 0.0
    %132 = vmatprep.mubr.f32.mxu0 0.0
    %133 = vmatmul.mubr.f32.gmra.mrb[0].mxu0 %v43
    %v134 = vpop.f32.mrb[0].mxu0
    %v135 = vadd.f32 %v66, %v134
    %v136 = vpop.f32.mrb[0].mxu0
    %137 = vmatprep.mubr.f32.mxu0 0.0
    %138 = vmatmul.mubr.f32.gmra.mrb[0].mxu0 %v44
    %v139 = vpop.f32.mrb[0].mxu0
    %v140 = vadd.f32 %v66, %v139
    %v141 = vpop.f32.mrb[0].mxu0
    %142 = vdwg.mxu0
    %143 = vst [vmem:[#allocation7] sm:$0xff] %v135
    %144 = vst [vmem:[#allocation7 + $0x8] sm:$0xff] %v140
    // Predicated region
    $region22: #{tpu_custom_call.1} parent=1 // pred_check
      _
    $region23: #{tpu_custom_call.1} parent=1 // pred_check_branch
      %146 = sbr.rel (0) target = $region25
    $region24: #{tpu_custom_call.1} parent=1 // pred_region
      %s148 = ssub.s32 256, 256
      %149 = vsyncadd [#allocation4], %s148
      %s150 = sshll.u32 [#allocation7], 4
      %s151 = int_to_ptr.vmem [resolvable:$true] %s150
      %156 = dma.vmem_to_hbm [thread:$0]  %s151, 256, %s3, [#allocation4], 128, 128, 8
    $region25: #{tpu_custom_call.1} parent=1 // pred_fallthru
      _
    // Predicated region
    $region26: #{tpu_custom_call.1} parent=1 // pred_check
      _
    $region27: #{tpu_custom_call.1} parent=1 // pred_check_branch
      %158 = sbr.rel (0) target = $region29
    $region28: #{tpu_custom_call.1} parent=1 // pred_region
      %159 = dma.done [#allocation4], 256
    $region29: #{tpu_custom_call.1} parent=1 // pred_fallthru
      _
    %160 = vsyncpa [#allocation3], 1
    %161 = vsyncpa [#allocation6], 1
    %162 = vsyncpa [#allocation4], 1

</llo_original>
